<compile_context>
chip_gen: v7x
topology: tpu7x:2x2x1
jax: 0.10.0
libtpu: 0.0.40
codegen_flags: <defaults>
</compile_context>

<pallas_src>
import functools

import jax
import jax.numpy as jnp
from jax.experimental import pallas as pl
from jax.experimental.pallas import tpu as pltpu

NUM_LAYERS = 2
LN_EPS = 1e-5


def _round_up(a, m):
    return -(-a // m) * m


# --------------------------------------------------------------------------
# Kernel
# --------------------------------------------------------------------------
def _fnn_user_embedding_kernel(
    len_ref,      # (TB, 1)      int32  valid history length per batch row
    x_ref,        # (TB, S, Dp)  f32    padded item-history embeddings
    vecs_ref,     # (L, 8, Dp)   f32    packed per-layer vectors (see _pack_params)
    w1_ref,       # (L, Dp, Hp)  f32    FFN first linear weight  (lane-padded)
    b1_ref,       # (L, 1, Hp)   f32    FFN first linear bias
    w2_ref,       # (L, Hp, Dp)  f32    FFN second linear weight
    o_ref,        # (TB, Dp)     f32    pooled user embeddings (lane-dense)
    *,
    num_layers,
    tb,
    seq,
    dim_p,
    dim_true,
    use_bf16,
):
    n = tb * seq
    x = x_ref[...].reshape(n, dim_p)          # fold TB*S rows into the matmul M dim

    # Rebuild the padding mask from per-row lengths (no mask DMA stream).
    pos = jax.lax.broadcasted_iota(jnp.int32, (seq, 1), 0)           # (S, 1)
    lens = len_ref[...].reshape(tb, 1, 1)                            # (TB, 1, 1)
    valid3 = pos[None, :, :] < lens                                  # (TB, S, 1) bool
    vmask3 = valid3.astype(jnp.float32)
    m_flat = vmask3.reshape(n, 1)                                    # (TB*S, 1)

    inv_d = jnp.float32(1.0 / dim_true)       # true-D divisor (lanes are padded)
    eps = jnp.float32(LN_EPS)
    neg = jnp.float32(-1e30)                  # finite sentinel (no inf/NaN paths)

    def layer_norm(v, g, b):
        # one-pass variance + rsqrt (EUP); clamp guards f32 cancellation.
        # Padded lanes of v are 0 and g/b are 0 there -> output stays 0.
        mu = jnp.sum(v, axis=-1, keepdims=True) * inv_d
        ms = jnp.sum(v * v, axis=-1, keepdims=True) * inv_d
        var = jnp.maximum(ms - mu * mu, 0.0)
        return (v - mu) * jax.lax.rsqrt(var + eps) * g + b

    def masked_softmax(scores):
        # softmax over the S positions of each batch row (torch softmax(dim=1)).
        # TODO(synk): for S >= ~64 switch these intermediates to a (TB, S)
        # lane-major layout (S on lanes) instead of the lane-sparse (TB, S, 1).
        s = jnp.where(valid3, scores.reshape(tb, seq, 1), neg)       # (TB, S, 1)
        s_max = jnp.max(s, axis=1, keepdims=True)                    # (TB, 1, 1)
        e = jnp.exp(s - s_max) * vmask3
        denom = jnp.maximum(jnp.sum(e, axis=1, keepdims=True), jnp.float32(1e-30))
        r = pl.reciprocal(denom, approx=True)         # EUP seed ...
        r = r * (2.0 - denom * r)                     # ... + 1 NR step -> ~f32 exact
        return (e * r).reshape(n, 1)

    def ffn_matmul(a, w):
        if use_bf16:   # opt-in: full-rate MXU on v6e/v7x, f32 accumulate
            return jnp.dot(a.astype(jnp.bfloat16), w.astype(jnp.bfloat16),
                           preferred_element_type=jnp.float32)
        return jnp.dot(a, w, preferred_element_type=jnp.float32)

    for i in range(num_layers):               # num_layers is static -> unrolled
        vecs = vecs_ref[i]                    # (8, Dp)
        aw, b2v = vecs[0:1], vecs[1:2]        # attention weight | FFN 2nd bias
        g1v, be1v = vecs[2:3], vecs[3:4]      # LayerNorm1 gamma / beta
        g2v, be2v = vecs[4:5], vecs[5:6]      # LayerNorm2 gamma / beta

        # --- attention sub-layer (dropout = identity) ---
        scores = jnp.sum(x * aw, axis=-1, keepdims=True)             # (TB*S, 1)
        weights = masked_softmax(scores)
        x1 = layer_norm(x + weights * x, g1v, be1v)

        # --- FFN sub-layer (dropout = identity) ---
        h = jnp.maximum(ffn_matmul(x1, w1_ref[i]) + b1_ref[i], 0.0)  # ReLU
        ffn = ffn_matmul(h, w2_ref[i]) + b2v
        x = layer_norm(x1 + ffn, g2v, be2v) * m_flat                 # masked_fill 0

    # --- final attention pooling ---
    fw = vecs_ref[0][6:7]                     # (1, Dp) final attention weight
    scores = jnp.sum(x * fw, axis=-1, keepdims=True)
    weights = masked_softmax(scores)
    o_ref[...] = jnp.sum((weights * x).reshape(tb, seq, dim_p), axis=1)  # (TB, Dp)


# --------------------------------------------------------------------------
# Tiling / VMEM budgeting
# --------------------------------------------------------------------------
@functools.lru_cache(maxsize=None)
def _vmem_budget_bytes():
    """Per-generation scoped-VMEM budget with headroom for Mosaic scratch."""
    cap = 64 * 1024 * 1024
    try:
        cap = int(pltpu.get_tpu_info().vmem_capacity_bytes)
    except Exception:
        pass
    # 128 MiB chips (v5e/v6e) -> ~100 MiB; 64 MiB chips (v7x) -> ~50 MiB.
    return int(max(min(cap - (12 << 20), int(cap * 0.78)), 32 << 20))


def _choose_tb(B, Sp, Dp, Hp, L, budget):
    """Batch rows per grid step: largest lane-dense x block (<= ~8 MiB) that,
    together with in-kernel temporaries and resident weights, fits the budget;
    keep >= 2 grid steps for v7x megacore unless the batch is tiny."""
    f32 = 4
    row_x = Sp * Dp * f32
    # resident packed weights, worst-case double-buffered
    wt = 2 * L * (8 * Dp + 2 * Dp * Hp + Hp) * f32
    # per-row VMEM: x stream double-buffered (2x Dp) + live temps x, x1, ffn
    # (3x Dp) + h (Hp) + mask/scores slack + output stream
    per_row = Sp * (5 * Dp + Hp) * f32 + Sp * 16 + 4 * Dp * f32
    avail = budget - wt - (4 << 20)
    # TODO(synk): sequence-tile the layer when a single row exceeds the budget.
    tb_fit = max(int(avail // per_row), 8)
    tb_tgt = max(int((8 << 20) // row_x), 8)      # <= ~8 MiB x block per step
    tb = min(tb_fit, tb_tgt)
    if B > 16:                                    # >= 2 grid steps (v7x: 2 TCs)
        tb = min(tb, _round_up(-(-B // 2), 8))
    tb = max((tb // 8) * 8, 8)                    # 8-aligned for BlockSpec dims
    return B if B <= tb else tb                   # tiny batch: one full block


# --------------------------------------------------------------------------
# Parameter packing (10 tensors -> 4 kernel inputs, lane-padded)
# --------------------------------------------------------------------------
def _pack_params(params, D, Dp, Hp, L):
    attn_w, w1, b1, w2, b2, g1, be1, g2, be2, fw = params
    H = 2 * D
    fw_l = jnp.broadcast_to(fw.reshape(1, 1, D), (L, 1, D))
    pad_row = jnp.zeros((L, 1, D), jnp.float32)
    # rows: 0 attn_w | 1 b2 | 2 g1 | 3 be1 | 4 g2 | 5 be2 | 6 final attn w | 7 pad
    vec_pack = jnp.concatenate([attn_w, b2, g1, be1, g2, be2, fw_l, pad_row], axis=1)
    # Zero-pad the feature lanes: gamma/beta padded with 0 keeps padded lanes 0.
    vec_pack = jnp.pad(vec_pack, ((0, 0), (0, 0), (0, Dp - D))).astype(jnp.float32)
    w1p = jnp.pad(w1, ((0, 0), (0, Dp - D), (0, Hp - H))).astype(jnp.float32)
    b1p = jnp.pad(b1, ((0, 0), (0, 0), (0, Hp - H))).astype(jnp.float32)
    w2p = jnp.pad(w2, ((0, 0), (0, Hp - H), (0, Dp - D))).astype(jnp.float32)
    return vec_pack, w1p, b1p, w2p


# --------------------------------------------------------------------------
# pallas_call construction (cached: build once per shape configuration)
# --------------------------------------------------------------------------
@functools.lru_cache(maxsize=None)
def _build_call(Bp, Sp, Dp, Hp, L, TB, D_true, vmem_budget, use_bf16):
    kernel = functools.partial(
        _fnn_user_embedding_kernel,
        num_layers=L, tb=TB, seq=Sp, dim_p=Dp, dim_true=D_true, use_bf16=use_bf16)

    grid_spec = pltpu.PrefetchScalarGridSpec(
        num_scalar_prefetch=0,
        grid=(Bp // TB,),
        in_specs=[
            pl.BlockSpec((TB, 1), lambda b: (b, 0)),           # per-row lengths
            pl.BlockSpec((TB, Sp, Dp), lambda b: (b, 0, 0)),   # padded embeddings
            # Constant index_maps -> weights stay resident (DMA'd once).
            pl.BlockSpec((L, 8, Dp), lambda b: (0, 0, 0)),     # packed vectors
            pl.BlockSpec((L, Dp, Hp), lambda b: (0, 0, 0)),    # FFN W1
            pl.BlockSpec((L, 1, Hp), lambda b: (0, 0, 0)),     # FFN b1
            pl.BlockSpec((L, Hp, Dp), lambda b: (0, 0, 0)),    # FFN W2
        ],
        out_specs=pl.BlockSpec((TB, Dp), lambda b: (b, 0)),
    )
    return pl.pallas_call(
        kernel,
        out_shape=jax.ShapeDtypeStruct((Bp, Dp), jnp.float32),
        grid_spec=grid_spec,
        compiler_params=pltpu.CompilerParams(
            dimension_semantics=("parallel",),     # shard batch blocks across TCs
            vmem_limit_bytes=int(vmem_budget)),
    )


# --------------------------------------------------------------------------
# Public wrapper
# --------------------------------------------------------------------------
def fnn_user_embedding(padded, lengths, params, *, use_bf16_matmul=False):
    """padded: (B, S, D) f32 (zero past each length), lengths: (B,) int -> (B, D)."""
    B, S, D = padded.shape
    L = NUM_LAYERS

    # Lane-dense padding: D and 2D up to multiples of 128, S to a sublane multiple.
    Dp = _round_up(max(D, 1), 128)
    Hp = _round_up(max(2 * D, 1), 128)
    Sp = _round_up(S, 8)

    budget = _vmem_budget_bytes()
    TB = _choose_tb(B, Sp, Dp, Hp, L, budget)
    Bp = pl.cdiv(B, TB) * TB

    x = padded.astype(jnp.float32)
    if Sp != S or Dp != D:
        x = jnp.pad(x, ((0, 0), (0, Sp - S), (0, Dp - D)))
    lens = lengths.astype(jnp.int32).reshape(B, 1)
    if Bp != B:
        x = jnp.pad(x, ((0, Bp - B), (0, 0), (0, 0)))
        lens = jnp.pad(lens, ((0, Bp - B), (0, 0)))   # padded rows: length 0 -> output 0

    vec_pack, w1p, b1p, w2p = _pack_params(params, D, Dp, Hp, L)
    call = _build_call(Bp, Sp, Dp, Hp, L, TB, D, budget, bool(use_bf16_matmul))
    out = call(lens, x, vec_pack, w1p, b1p, w2p)
    return out[:B, :D]


# --------------------------------------------------------------------------
# Pure-JAX reference & test harness
# --------------------------------------------------------------------------
def reference_forward(padded, mask, params):
    """Pure-JAX reference mirroring the PyTorch forward (eval mode)."""
    attn_w, w1, b1, w2, b2, g1, be1, g2, be2, fw = params
    m = mask[:, :, None].astype(jnp.float32)
    x = padded

    def ln(v, g, b):
        mu = v.mean(-1, keepdims=True)
        var = ((v - mu) ** 2).mean(-1, keepdims=True)
        return (v - mu) / jnp.sqrt(var + LN_EPS) * g + b

    for i in range(NUM_LAYERS):
        scores = jnp.sum(x * attn_w[i], -1, keepdims=True)
        scores = jnp.where(m > 0, scores, -jnp.inf)
        w = jax.nn.softmax(scores, axis=1)
        x1 = ln(x + w * x, g1[i], be1[i])
        h = jax.nn.relu(x1 @ w1[i] + b1[i])
        ffn = h @ w2[i] + b2[i]
        x = ln(x1 + ffn, g2[i], be2[i]) * m

    scores = jnp.sum(x * fw, -1, keepdims=True)
    scores = jnp.where(m > 0, scores, -jnp.inf)
    w = jax.nn.softmax(scores, axis=1)
    return jnp.sum(w * x, axis=1)


def make_params(key, D, L):
    ks = jax.random.split(key, 12)
    s = 0.1
    attn_w = s * jax.random.normal(ks[0], (L, 1, D), jnp.float32)
    w1 = s * jax.random.normal(ks[1], (L, D, 2 * D), jnp.float32)
    b1 = s * jax.random.normal(ks[2], (L, 1, 2 * D), jnp.float32)
    w2 = s * jax.random.normal(ks[3], (L, 2 * D, D), jnp.float32)
    b2 = s * jax.random.normal(ks[4], (L, 1, D), jnp.float32)
    g1 = 1.0 + s * jax.random.normal(ks[5], (L, 1, D), jnp.float32)
    be1 = s * jax.random.normal(ks[6], (L, 1, D), jnp.float32)
    g2 = 1.0 + s * jax.random.normal(ks[7], (L, 1, D), jnp.float32)
    be2 = s * jax.random.normal(ks[8], (L, 1, D), jnp.float32)
    fw = s * jax.random.normal(ks[9], (1, D), jnp.float32)
    return (attn_w, w1, b1, w2, b2, g1, be1, g2, be2, fw)


if __name__ == "__main__":
    key = jax.random.PRNGKey(0)
    k_emb, k_par = jax.random.split(key)

    B, S, D = 2, 8, 32
    lengths = jnp.array([5, 8], dtype=jnp.int32)          # variable-length histories
    # pad_sequence equivalent: padded [B, S, D], zeros beyond each length
    raw = jax.random.normal(k_emb, (B, S, D), jnp.float32)
    mask = jnp.arange(S)[None, :] < lengths[:, None]      # (B, S) bool
    padded = raw * mask[:, :, None].astype(jnp.float32)

    params = make_params(k_par, D, NUM_LAYERS)

    fwd = jax.jit(fnn_user_embedding)                     # trace/compile once
    out = jax.block_until_ready(fwd(padded, lengths, params))

    ref = reference_forward(padded, mask, params)
    assert out.shape == (B, D)
    err = float(jnp.max(jnp.abs(out - ref)))
    assert jnp.allclose(out, ref, rtol=1e-4, atol=1e-4), f"mismatch: max abs err {err}"

    print("KERNEL_OK")
</pallas_src>

<mosaic_0001>
module attributes {stable_mosaic.version = 11 : i64} {
  func.func @_fnn_user_embedding_kernel(%arg0: i32, %arg1: memref<2x1xi32, #tpu.memory_space<vmem>>, %arg2: memref<2x8x128xf32, #tpu.memory_space<vmem>>, %arg3: memref<2x8x128xf32, #tpu.memory_space<vmem>>, %arg4: memref<2x128x128xf32, #tpu.memory_space<vmem>>, %arg5: memref<2x1x128xf32, #tpu.memory_space<vmem>>, %arg6: memref<2x128x128xf32, #tpu.memory_space<vmem>>, %arg7: memref<2x128xf32, #tpu.memory_space<vmem>>) attributes {dimension_semantics = [#tpu.dimension_semantics<parallel>], iteration_bounds = array<i64: 1>, scalar_prefetch = 0 : i64, scratch_operands = 0 : i64, tpu.core_type = #tpu.core_type<tc>, window_params = [{transform_indices = @transform_0, window_bounds = array<i64: 2, 1>}, {transform_indices = @transform_1, window_bounds = array<i64: 2, 8, 128>}, {pipeline_mode = #tpu.pipeline_mode<synchronous>, transform_indices = @transform_2, window_bounds = array<i64: 2, 8, 128>}, {pipeline_mode = #tpu.pipeline_mode<synchronous>, transform_indices = @transform_3, window_bounds = array<i64: 2, 128, 128>}, {pipeline_mode = #tpu.pipeline_mode<synchronous>, transform_indices = @transform_4, window_bounds = array<i64: 2, 1, 128>}, {pipeline_mode = #tpu.pipeline_mode<synchronous>, transform_indices = @transform_5, window_bounds = array<i64: 2, 128, 128>}, {transform_indices = @transform_6, window_bounds = array<i64: 2, 128>}]} {
    %c0 = arith.constant 0 : index
    %c0_0 = arith.constant 0 : index
    %c0_1 = arith.constant 0 : index
    %0 = vector.load %arg2[%c0, %c0_0, %c0_1] : memref<2x8x128xf32, #tpu.memory_space<vmem>>, vector<2x8x128xf32>
    %1 = vector.shape_cast %0 : vector<2x8x128xf32> to vector<16x128xf32>
    %2 = tpu.iota {dimensions = array<i32: 0>} : vector<8x1xi32>
    %c0_2 = arith.constant 0 : index
    %c0_3 = arith.constant 0 : index
    %3 = vector.load %arg1[%c0_2, %c0_3] : memref<2x1xi32, #tpu.memory_space<vmem>>, vector<2x1xi32>
    %4 = vector.shape_cast %3 : vector<2x1xi32> to vector<2x1x1xi32>
    %5 = vector.shape_cast %2 : vector<8x1xi32> to vector<1x8x1xi32>
    %6 = vector.broadcast %5 : vector<1x8x1xi32> to vector<2x8x1xi32>
    %7 = vector.broadcast %4 : vector<2x1x1xi32> to vector<2x8x1xi32>
    %8 = arith.cmpi slt, %6, %7 : vector<2x8x1xi32>
    %9 = arith.extui %8 : vector<2x8x1xi1> to vector<2x8x1xi32>
    %10 = arith.sitofp %9 : vector<2x8x1xi32> to vector<2x8x1xf32>
    %11 = vector.shape_cast %10 : vector<2x8x1xf32> to vector<16x1xf32>
    %c0_4 = arith.constant 0 : index
    %c0_5 = arith.constant 0 : index
    %c0_6 = arith.constant 0 : index
    %12 = vector.load %arg3[%c0_4, %c0_5, %c0_6] : memref<2x8x128xf32, #tpu.memory_space<vmem>>, vector<1x8x128xf32>
    %13 = vector.shape_cast %12 : vector<1x8x128xf32> to vector<8x128xf32>
    %14 = vector.extract_strided_slice %13 {offsets = [0, 0], sizes = [1, 128], strides = [1, 1]} : vector<8x128xf32> to vector<1x128xf32>
    %15 = vector.extract_strided_slice %13 {offsets = [1, 0], sizes = [1, 128], strides = [1, 1]} : vector<8x128xf32> to vector<1x128xf32>
    %16 = vector.extract_strided_slice %13 {offsets = [2, 0], sizes = [1, 128], strides = [1, 1]} : vector<8x128xf32> to vector<1x128xf32>
    %17 = vector.extract_strided_slice %13 {offsets = [3, 0], sizes = [1, 128], strides = [1, 1]} : vector<8x128xf32> to vector<1x128xf32>
    %18 = vector.extract_strided_slice %13 {offsets = [4, 0], sizes = [1, 128], strides = [1, 1]} : vector<8x128xf32> to vector<1x128xf32>
    %19 = vector.extract_strided_slice %13 {offsets = [5, 0], sizes = [1, 128], strides = [1, 1]} : vector<8x128xf32> to vector<1x128xf32>
    %20 = vector.broadcast %14 : vector<1x128xf32> to vector<16x128xf32>
    %21 = arith.mulf %1, %20 : vector<16x128xf32>
    %cst = arith.constant dense<0.000000e+00> : vector<16xf32>
    %22 = vector.multi_reduction <add>, %21, %cst [1] : vector<16x128xf32> to vector<16xf32>
    %23 = vector.shape_cast %22 : vector<16xf32> to vector<16x1xf32>
    %24 = vector.shape_cast %23 : vector<16x1xf32> to vector<2x8x1xf32>
    %cst_7 = arith.constant -1.000000e+30 : f32
    %25 = vector.broadcast %cst_7 : f32 to vector<2x8x1xf32>
    %26 = arith.select %8, %24, %25 : vector<2x8x1xi1>, vector<2x8x1xf32>
    %cst_8 = arith.constant dense<0xFF800000> : vector<2x1xf32>
    %27 = vector.multi_reduction <maximumf>, %26, %cst_8 [1] : vector<2x8x1xf32> to vector<2x1xf32>
    %28 = vector.shape_cast %27 : vector<2x1xf32> to vector<2x1x1xf32>
    %29 = vector.broadcast %28 : vector<2x1x1xf32> to vector<2x8x1xf32>
    %30 = arith.subf %26, %29 : vector<2x8x1xf32>
    %31 = math.exp %30 : vector<2x8x1xf32>
    %32 = arith.mulf %31, %10 : vector<2x8x1xf32>
    %cst_9 = arith.constant dense<0.000000e+00> : vector<2x1xf32>
    %33 = vector.multi_reduction <add>, %32, %cst_9 [1] : vector<2x8x1xf32> to vector<2x1xf32>
    %34 = vector.shape_cast %33 : vector<2x1xf32> to vector<2x1x1xf32>
    %cst_10 = arith.constant 1.000000e-30 : f32
    %35 = vector.broadcast %cst_10 : f32 to vector<2x1x1xf32>
    %36 = arith.maximumf %34, %35 : vector<2x1x1xf32>
    %37 = tpu.reciprocal %36 {approx = true} : vector<2x1x1xf32> -> vector<2x1x1xf32>
    %38 = arith.mulf %36, %37 : vector<2x1x1xf32>
    %cst_11 = arith.constant 2.000000e+00 : f32
    %39 = vector.broadcast %cst_11 : f32 to vector<2x1x1xf32>
    %40 = arith.subf %39, %38 : vector<2x1x1xf32>
    %41 = arith.mulf %37, %40 : vector<2x1x1xf32>
    %42 = vector.broadcast %41 : vector<2x1x1xf32> to vector<2x8x1xf32>
    %43 = arith.mulf %32, %42 : vector<2x8x1xf32>
    %44 = vector.shape_cast %43 : vector<2x8x1xf32> to vector<16x1xf32>
    %45 = vector.broadcast %44 : vector<16x1xf32> to vector<16x128xf32>
    %46 = arith.mulf %45, %1 : vector<16x128xf32>
    %47 = arith.addf %1, %46 : vector<16x128xf32>
    %cst_12 = arith.constant dense<0.000000e+00> : vector<16xf32>
    %48 = vector.multi_reduction <add>, %47, %cst_12 [1] : vector<16x128xf32> to vector<16xf32>
    %49 = vector.shape_cast %48 : vector<16xf32> to vector<16x1xf32>
    %cst_13 = arith.constant 3.125000e-02 : f32
    %50 = vector.broadcast %cst_13 : f32 to vector<16x1xf32>
    %51 = arith.mulf %49, %50 : vector<16x1xf32>
    %52 = arith.mulf %47, %47 : vector<16x128xf32>
    %cst_14 = arith.constant dense<0.000000e+00> : vector<16xf32>
    %53 = vector.multi_reduction <add>, %52, %cst_14 [1] : vector<16x128xf32> to vector<16xf32>
    %54 = vector.shape_cast %53 : vector<16xf32> to vector<16x1xf32>
    %cst_15 = arith.constant 3.125000e-02 : f32
    %55 = vector.broadcast %cst_15 : f32 to vector<16x1xf32>
    %56 = arith.mulf %54, %55 : vector<16x1xf32>
    %57 = arith.mulf %51, %51 : vector<16x1xf32>
    %58 = arith.subf %56, %57 : vector<16x1xf32>
    %cst_16 = arith.constant 0.000000e+00 : f32
    %59 = vector.broadcast %cst_16 : f32 to vector<16x1xf32>
    %60 = arith.maximumf %58, %59 : vector<16x1xf32>
    %61 = vector.broadcast %51 : vector<16x1xf32> to vector<16x128xf32>
    %62 = arith.subf %47, %61 : vector<16x128xf32>
    %cst_17 = arith.constant 9.99999974E-6 : f32
    %63 = vector.broadcast %cst_17 : f32 to vector<16x1xf32>
    %64 = arith.addf %60, %63 : vector<16x1xf32>
    %65 = math.rsqrt %64 : vector<16x1xf32>
    %66 = vector.broadcast %65 : vector<16x1xf32> to vector<16x128xf32>
    %67 = arith.mulf %62, %66 : vector<16x128xf32>
    %68 = vector.broadcast %16 : vector<1x128xf32> to vector<16x128xf32>
    %69 = arith.mulf %67, %68 : vector<16x128xf32>
    %70 = vector.broadcast %17 : vector<1x128xf32> to vector<16x128xf32>
    %71 = arith.addf %69, %70 : vector<16x128xf32>
    %c0_18 = arith.constant 0 : index
    %c0_19 = arith.constant 0 : index
    %c0_20 = arith.constant 0 : index
    %72 = vector.load %arg4[%c0_18, %c0_19, %c0_20] : memref<2x128x128xf32, #tpu.memory_space<vmem>>, vector<1x128x128xf32>
    %73 = vector.shape_cast %72 : vector<1x128x128xf32> to vector<128x128xf32>
    %cst_21 = arith.constant dense<0.000000e+00> : vector<16x128xf32>
    %74 = tpu.matmul %71, %73, %cst_21 {dimension_numbers = #tpu.dot_dimension_numbers<[1], [0], [0], [1], [0, 0, 1, 1], [], []>} : vector<16x128xf32>, vector<128x128xf32>, vector<16x128xf32> -> vector<16x128xf32>
    %c0_22 = arith.constant 0 : index
    %c0_23 = arith.constant 0 : index
    %c0_24 = arith.constant 0 : index
    %75 = vector.load %arg5[%c0_22, %c0_23, %c0_24] : memref<2x1x128xf32, #tpu.memory_space<vmem>>, vector<1x1x128xf32>
    %76 = vector.shape_cast %75 : vector<1x1x128xf32> to vector<1x128xf32>
    %77 = vector.broadcast %76 : vector<1x128xf32> to vector<16x128xf32>
    %78 = arith.addf %74, %77 : vector<16x128xf32>
    %cst_25 = arith.constant 0.000000e+00 : f32
    %79 = vector.broadcast %cst_25 : f32 to vector<16x128xf32>
    %80 = arith.maximumf %78, %79 : vector<16x128xf32>
    %c0_26 = arith.constant 0 : index
    %c0_27 = arith.constant 0 : index
    %c0_28 = arith.constant 0 : index
    %81 = vector.load %arg6[%c0_26, %c0_27, %c0_28] : memref<2x128x128xf32, #tpu.memory_space<vmem>>, vector<1x128x128xf32>
    %82 = vector.shape_cast %81 : vector<1x128x128xf32> to vector<128x128xf32>
    %cst_29 = arith.constant dense<0.000000e+00> : vector<16x128xf32>
    %83 = tpu.matmul %80, %82, %cst_29 {dimension_numbers = #tpu.dot_dimension_numbers<[1], [0], [0], [1], [0, 0, 1, 1], [], []>} : vector<16x128xf32>, vector<128x128xf32>, vector<16x128xf32> -> vector<16x128xf32>
    %84 = vector.broadcast %15 : vector<1x128xf32> to vector<16x128xf32>
    %85 = arith.addf %83, %84 : vector<16x128xf32>
    %86 = arith.addf %71, %85 : vector<16x128xf32>
    %cst_30 = arith.constant dense<0.000000e+00> : vector<16xf32>
    %87 = vector.multi_reduction <add>, %86, %cst_30 [1] : vector<16x128xf32> to vector<16xf32>
    %88 = vector.shape_cast %87 : vector<16xf32> to vector<16x1xf32>
    %cst_31 = arith.constant 3.125000e-02 : f32
    %89 = vector.broadcast %cst_31 : f32 to vector<16x1xf32>
    %90 = arith.mulf %88, %89 : vector<16x1xf32>
    %91 = arith.mulf %86, %86 : vector<16x128xf32>
    %cst_32 = arith.constant dense<0.000000e+00> : vector<16xf32>
    %92 = vector.multi_reduction <add>, %91, %cst_32 [1] : vector<16x128xf32> to vector<16xf32>
    %93 = vector.shape_cast %92 : vector<16xf32> to vector<16x1xf32>
    %cst_33 = arith.constant 3.125000e-02 : f32
    %94 = vector.broadcast %cst_33 : f32 to vector<16x1xf32>
    %95 = arith.mulf %93, %94 : vector<16x1xf32>
    %96 = arith.mulf %90, %90 : vector<16x1xf32>
    %97 = arith.subf %95, %96 : vector<16x1xf32>
    %cst_34 = arith.constant 0.000000e+00 : f32
    %98 = vector.broadcast %cst_34 : f32 to vector<16x1xf32>
    %99 = arith.maximumf %97, %98 : vector<16x1xf32>
    %100 = vector.broadcast %90 : vector<16x1xf32> to vector<16x128xf32>
    %101 = arith.subf %86, %100 : vector<16x128xf32>
    %cst_35 = arith.constant 9.99999974E-6 : f32
    %102 = vector.broadcast %cst_35 : f32 to vector<16x1xf32>
    %103 = arith.addf %99, %102 : vector<16x1xf32>
    %104 = math.rsqrt %103 : vector<16x1xf32>
    %105 = vector.broadcast %104 : vector<16x1xf32> to vector<16x128xf32>
    %106 = arith.mulf %101, %105 : vector<16x128xf32>
    %107 = vector.broadcast %18 : vector<1x128xf32> to vector<16x128xf32>
    %108 = arith.mulf %106, %107 : vector<16x128xf32>
    %109 = vector.broadcast %19 : vector<1x128xf32> to vector<16x128xf32>
    %110 = arith.addf %108, %109 : vector<16x128xf32>
    %111 = vector.broadcast %11 : vector<16x1xf32> to vector<16x128xf32>
    %112 = arith.mulf %110, %111 : vector<16x128xf32>
    %c1 = arith.constant 1 : index
    %c0_36 = arith.constant 0 : index
    %c0_37 = arith.constant 0 : index
    %113 = vector.load %arg3[%c1, %c0_36, %c0_37] : memref<2x8x128xf32, #tpu.memory_space<vmem>>, vector<1x8x128xf32>
    %114 = vector.shape_cast %113 : vector<1x8x128xf32> to vector<8x128xf32>
    %115 = vector.extract_strided_slice %114 {offsets = [0, 0], sizes = [1, 128], strides = [1, 1]} : vector<8x128xf32> to vector<1x128xf32>
    %116 = vector.extract_strided_slice %114 {offsets = [1, 0], sizes = [1, 128], strides = [1, 1]} : vector<8x128xf32> to vector<1x128xf32>
    %117 = vector.extract_strided_slice %114 {offsets = [2, 0], sizes = [1, 128], strides = [1, 1]} : vector<8x128xf32> to vector<1x128xf32>
    %118 = vector.extract_strided_slice %114 {offsets = [3, 0], sizes = [1, 128], strides = [1, 1]} : vector<8x128xf32> to vector<1x128xf32>
    %119 = vector.extract_strided_slice %114 {offsets = [4, 0], sizes = [1, 128], strides = [1, 1]} : vector<8x128xf32> to vector<1x128xf32>
    %120 = vector.extract_strided_slice %114 {offsets = [5, 0], sizes = [1, 128], strides = [1, 1]} : vector<8x128xf32> to vector<1x128xf32>
    %121 = vector.broadcast %115 : vector<1x128xf32> to vector<16x128xf32>
    %122 = arith.mulf %112, %121 : vector<16x128xf32>
    %cst_38 = arith.constant dense<0.000000e+00> : vector<16xf32>
    %123 = vector.multi_reduction <add>, %122, %cst_38 [1] : vector<16x128xf32> to vector<16xf32>
    %124 = vector.shape_cast %123 : vector<16xf32> to vector<16x1xf32>
    %125 = vector.shape_cast %124 : vector<16x1xf32> to vector<2x8x1xf32>
    %cst_39 = arith.constant -1.000000e+30 : f32
    %126 = vector.broadcast %cst_39 : f32 to vector<2x8x1xf32>
    %127 = arith.select %8, %125, %126 : vector<2x8x1xi1>, vector<2x8x1xf32>
    %cst_40 = arith.constant dense<0xFF800000> : vector<2x1xf32>
    %128 = vector.multi_reduction <maximumf>, %127, %cst_40 [1] : vector<2x8x1xf32> to vector<2x1xf32>
    %129 = vector.shape_cast %128 : vector<2x1xf32> to vector<2x1x1xf32>
    %130 = vector.broadcast %129 : vector<2x1x1xf32> to vector<2x8x1xf32>
    %131 = arith.subf %127, %130 : vector<2x8x1xf32>
    %132 = math.exp %131 : vector<2x8x1xf32>
    %133 = arith.mulf %132, %10 : vector<2x8x1xf32>
    %cst_41 = arith.constant dense<0.000000e+00> : vector<2x1xf32>
    %134 = vector.multi_reduction <add>, %133, %cst_41 [1] : vector<2x8x1xf32> to vector<2x1xf32>
    %135 = vector.shape_cast %134 : vector<2x1xf32> to vector<2x1x1xf32>
    %cst_42 = arith.constant 1.000000e-30 : f32
    %136 = vector.broadcast %cst_42 : f32 to vector<2x1x1xf32>
    %137 = arith.maximumf %135, %136 : vector<2x1x1xf32>
    %138 = tpu.reciprocal %137 {approx = true} : vector<2x1x1xf32> -> vector<2x1x1xf32>
    %139 = arith.mulf %137, %138 : vector<2x1x1xf32>
    %cst_43 = arith.constant 2.000000e+00 : f32
    %140 = vector.broadcast %cst_43 : f32 to vector<2x1x1xf32>
    %141 = arith.subf %140, %139 : vector<2x1x1xf32>
    %142 = arith.mulf %138, %141 : vector<2x1x1xf32>
    %143 = vector.broadcast %142 : vector<2x1x1xf32> to vector<2x8x1xf32>
    %144 = arith.mulf %133, %143 : vector<2x8x1xf32>
    %145 = vector.shape_cast %144 : vector<2x8x1xf32> to vector<16x1xf32>
    %146 = vector.broadcast %145 : vector<16x1xf32> to vector<16x128xf32>
    %147 = arith.mulf %146, %112 : vector<16x128xf32>
    %148 = arith.addf %112, %147 : vector<16x128xf32>
    %cst_44 = arith.constant dense<0.000000e+00> : vector<16xf32>
    %149 = vector.multi_reduction <add>, %148, %cst_44 [1] : vector<16x128xf32> to vector<16xf32>
    %150 = vector.shape_cast %149 : vector<16xf32> to vector<16x1xf32>
    %cst_45 = arith.constant 3.125000e-02 : f32
    %151 = vector.broadcast %cst_45 : f32 to vector<16x1xf32>
    %152 = arith.mulf %150, %151 : vector<16x1xf32>
    %153 = arith.mulf %148, %148 : vector<16x128xf32>
    %cst_46 = arith.constant dense<0.000000e+00> : vector<16xf32>
    %154 = vector.multi_reduction <add>, %153, %cst_46 [1] : vector<16x128xf32> to vector<16xf32>
    %155 = vector.shape_cast %154 : vector<16xf32> to vector<16x1xf32>
    %cst_47 = arith.constant 3.125000e-02 : f32
    %156 = vector.broadcast %cst_47 : f32 to vector<16x1xf32>
    %157 = arith.mulf %155, %156 : vector<16x1xf32>
    %158 = arith.mulf %152, %152 : vector<16x1xf32>
    %159 = arith.subf %157, %158 : vector<16x1xf32>
    %cst_48 = arith.constant 0.000000e+00 : f32
    %160 = vector.broadcast %cst_48 : f32 to vector<16x1xf32>
    %161 = arith.maximumf %159, %160 : vector<16x1xf32>
    %162 = vector.broadcast %152 : vector<16x1xf32> to vector<16x128xf32>
    %163 = arith.subf %148, %162 : vector<16x128xf32>
    %cst_49 = arith.constant 9.99999974E-6 : f32
    %164 = vector.broadcast %cst_49 : f32 to vector<16x1xf32>
    %165 = arith.addf %161, %164 : vector<16x1xf32>
    %166 = math.rsqrt %165 : vector<16x1xf32>
    %167 = vector.broadcast %166 : vector<16x1xf32> to vector<16x128xf32>
    %168 = arith.mulf %163, %167 : vector<16x128xf32>
    %169 = vector.broadcast %117 : vector<1x128xf32> to vector<16x128xf32>
    %170 = arith.mulf %168, %169 : vector<16x128xf32>
    %171 = vector.broadcast %118 : vector<1x128xf32> to vector<16x128xf32>
    %172 = arith.addf %170, %171 : vector<16x128xf32>
    %c1_50 = arith.constant 1 : index
    %c0_51 = arith.constant 0 : index
    %c0_52 = arith.constant 0 : index
    %173 = vector.load %arg4[%c1_50, %c0_51, %c0_52] : memref<2x128x128xf32, #tpu.memory_space<vmem>>, vector<1x128x128xf32>
    %174 = vector.shape_cast %173 : vector<1x128x128xf32> to vector<128x128xf32>
    %cst_53 = arith.constant dense<0.000000e+00> : vector<16x128xf32>
    %175 = tpu.matmul %172, %174, %cst_53 {dimension_numbers = #tpu.dot_dimension_numbers<[1], [0], [0], [1], [0, 0, 1, 1], [], []>} : vector<16x128xf32>, vector<128x128xf32>, vector<16x128xf32> -> vector<16x128xf32>
    %c1_54 = arith.constant 1 : index
    %c0_55 = arith.constant 0 : index
    %c0_56 = arith.constant 0 : index
    %176 = vector.load %arg5[%c1_54, %c0_55, %c0_56] : memref<2x1x128xf32, #tpu.memory_space<vmem>>, vector<1x1x128xf32>
    %177 = vector.shape_cast %176 : vector<1x1x128xf32> to vector<1x128xf32>
    %178 = vector.broadcast %177 : vector<1x128xf32> to vector<16x128xf32>
    %179 = arith.addf %175, %178 : vector<16x128xf32>
    %cst_57 = arith.constant 0.000000e+00 : f32
    %180 = vector.broadcast %cst_57 : f32 to vector<16x128xf32>
    %181 = arith.maximumf %179, %180 : vector<16x128xf32>
    %c1_58 = arith.constant 1 : index
    %c0_59 = arith.constant 0 : index
    %c0_60 = arith.constant 0 : index
    %182 = vector.load %arg6[%c1_58, %c0_59, %c0_60] : memref<2x128x128xf32, #tpu.memory_space<vmem>>, vector<1x128x128xf32>
    %183 = vector.shape_cast %182 : vector<1x128x128xf32> to vector<128x128xf32>
    %cst_61 = arith.constant dense<0.000000e+00> : vector<16x128xf32>
    %184 = tpu.matmul %181, %183, %cst_61 {dimension_numbers = #tpu.dot_dimension_numbers<[1], [0], [0], [1], [0, 0, 1, 1], [], []>} : vector<16x128xf32>, vector<128x128xf32>, vector<16x128xf32> -> vector<16x128xf32>
    %185 = vector.broadcast %116 : vector<1x128xf32> to vector<16x128xf32>
    %186 = arith.addf %184, %185 : vector<16x128xf32>
    %187 = arith.addf %172, %186 : vector<16x128xf32>
    %cst_62 = arith.constant dense<0.000000e+00> : vector<16xf32>
    %188 = vector.multi_reduction <add>, %187, %cst_62 [1] : vector<16x128xf32> to vector<16xf32>
    %189 = vector.shape_cast %188 : vector<16xf32> to vector<16x1xf32>
    %cst_63 = arith.constant 3.125000e-02 : f32
    %190 = vector.broadcast %cst_63 : f32 to vector<16x1xf32>
    %191 = arith.mulf %189, %190 : vector<16x1xf32>
    %192 = arith.mulf %187, %187 : vector<16x128xf32>
    %cst_64 = arith.constant dense<0.000000e+00> : vector<16xf32>
    %193 = vector.multi_reduction <add>, %192, %cst_64 [1] : vector<16x128xf32> to vector<16xf32>
    %194 = vector.shape_cast %193 : vector<16xf32> to vector<16x1xf32>
    %cst_65 = arith.constant 3.125000e-02 : f32
    %195 = vector.broadcast %cst_65 : f32 to vector<16x1xf32>
    %196 = arith.mulf %194, %195 : vector<16x1xf32>
    %197 = arith.mulf %191, %191 : vector<16x1xf32>
    %198 = arith.subf %196, %197 : vector<16x1xf32>
    %cst_66 = arith.constant 0.000000e+00 : f32
    %199 = vector.broadcast %cst_66 : f32 to vector<16x1xf32>
    %200 = arith.maximumf %198, %199 : vector<16x1xf32>
    %201 = vector.broadcast %191 : vector<16x1xf32> to vector<16x128xf32>
    %202 = arith.subf %187, %201 : vector<16x128xf32>
    %cst_67 = arith.constant 9.99999974E-6 : f32
    %203 = vector.broadcast %cst_67 : f32 to vector<16x1xf32>
    %204 = arith.addf %200, %203 : vector<16x1xf32>
    %205 = math.rsqrt %204 : vector<16x1xf32>
    %206 = vector.broadcast %205 : vector<16x1xf32> to vector<16x128xf32>
    %207 = arith.mulf %202, %206 : vector<16x128xf32>
    %208 = vector.broadcast %119 : vector<1x128xf32> to vector<16x128xf32>
    %209 = arith.mulf %207, %208 : vector<16x128xf32>
    %210 = vector.broadcast %120 : vector<1x128xf32> to vector<16x128xf32>
    %211 = arith.addf %209, %210 : vector<16x128xf32>
    %212 = vector.broadcast %11 : vector<16x1xf32> to vector<16x128xf32>
    %213 = arith.mulf %211, %212 : vector<16x128xf32>
    %c0_68 = arith.constant 0 : index
    %c0_69 = arith.constant 0 : index
    %c0_70 = arith.constant 0 : index
    %214 = vector.load %arg3[%c0_68, %c0_69, %c0_70] : memref<2x8x128xf32, #tpu.memory_space<vmem>>, vector<1x8x128xf32>
    %215 = vector.shape_cast %214 : vector<1x8x128xf32> to vector<8x128xf32>
    %216 = vector.extract_strided_slice %215 {offsets = [6, 0], sizes = [1, 128], strides = [1, 1]} : vector<8x128xf32> to vector<1x128xf32>
    %217 = vector.broadcast %216 : vector<1x128xf32> to vector<16x128xf32>
    %218 = arith.mulf %213, %217 : vector<16x128xf32>
    %cst_71 = arith.constant dense<0.000000e+00> : vector<16xf32>
    %219 = vector.multi_reduction <add>, %218, %cst_71 [1] : vector<16x128xf32> to vector<16xf32>
    %220 = vector.shape_cast %219 : vector<16xf32> to vector<16x1xf32>
    %221 = vector.shape_cast %220 : vector<16x1xf32> to vector<2x8x1xf32>
    %cst_72 = arith.constant -1.000000e+30 : f32
    %222 = vector.broadcast %cst_72 : f32 to vector<2x8x1xf32>
    %223 = arith.select %8, %221, %222 : vector<2x8x1xi1>, vector<2x8x1xf32>
    %cst_73 = arith.constant dense<0xFF800000> : vector<2x1xf32>
    %224 = vector.multi_reduction <maximumf>, %223, %cst_73 [1] : vector<2x8x1xf32> to vector<2x1xf32>
    %225 = vector.shape_cast %224 : vector<2x1xf32> to vector<2x1x1xf32>
    %226 = vector.broadcast %225 : vector<2x1x1xf32> to vector<2x8x1xf32>
    %227 = arith.subf %223, %226 : vector<2x8x1xf32>
    %228 = math.exp %227 : vector<2x8x1xf32>
    %229 = arith.mulf %228, %10 : vector<2x8x1xf32>
    %cst_74 = arith.constant dense<0.000000e+00> : vector<2x1xf32>
    %230 = vector.multi_reduction <add>, %229, %cst_74 [1] : vector<2x8x1xf32> to vector<2x1xf32>
    %231 = vector.shape_cast %230 : vector<2x1xf32> to vector<2x1x1xf32>
    %cst_75 = arith.constant 1.000000e-30 : f32
    %232 = vector.broadcast %cst_75 : f32 to vector<2x1x1xf32>
    %233 = arith.maximumf %231, %232 : vector<2x1x1xf32>
    %234 = tpu.reciprocal %233 {approx = true} : vector<2x1x1xf32> -> vector<2x1x1xf32>
    %235 = arith.mulf %233, %234 : vector<2x1x1xf32>
    %cst_76 = arith.constant 2.000000e+00 : f32
    %236 = vector.broadcast %cst_76 : f32 to vector<2x1x1xf32>
    %237 = arith.subf %236, %235 : vector<2x1x1xf32>
    %238 = arith.mulf %234, %237 : vector<2x1x1xf32>
    %239 = vector.broadcast %238 : vector<2x1x1xf32> to vector<2x8x1xf32>
    %240 = arith.mulf %229, %239 : vector<2x8x1xf32>
    %241 = vector.shape_cast %240 : vector<2x8x1xf32> to vector<16x1xf32>
    %242 = vector.broadcast %241 : vector<16x1xf32> to vector<16x128xf32>
    %243 = arith.mulf %242, %213 : vector<16x128xf32>
    %244 = vector.shape_cast %243 : vector<16x128xf32> to vector<2x8x128xf32>
    %cst_77 = arith.constant dense<0.000000e+00> : vector<2x128xf32>
    %245 = vector.multi_reduction <add>, %244, %cst_77 [1] : vector<2x8x128xf32> to vector<2x128xf32>
    %c0_78 = arith.constant 0 : index
    %c0_79 = arith.constant 0 : index
    %246 = vector.load %arg7[%c0_78, %c0_79] : memref<2x128xf32, #tpu.memory_space<vmem>>, vector<2x128xf32>
    tpu.vector_store %arg7[%c0_78, %c0_79], %245 {strides = array<i32>} : memref<2x128xf32, #tpu.memory_space<vmem>>, vector<2x128xf32>,
    return
  }
  func.func @transform_0(%arg0: i32) -> (i32, i32) {
    %c0_i32 = arith.constant 0 : i32
    %c0_i32_0 = arith.constant 0 : i32
    return %arg0, %c0_i32 : i32, i32
  }
  func.func @transform_1(%arg0: i32) -> (i32, i32, i32) {
    %c0_i32 = arith.constant 0 : i32
    %c0_i32_0 = arith.constant 0 : i32
    %c0_i32_1 = arith.constant 0 : i32
    return %arg0, %c0_i32, %c0_i32_0 : i32, i32, i32
  }
  func.func @transform_2(%arg0: i32) -> (i32, i32, i32) {
    %c0_i32 = arith.constant 0 : i32
    %c0_i32_0 = arith.constant 0 : i32
    %c0_i32_1 = arith.constant 0 : i32
    %c0_i32_2 = arith.constant 0 : i32
    return %c0_i32, %c0_i32_0, %c0_i32_1 : i32, i32, i32
  }
  func.func @transform_3(%arg0: i32) -> (i32, i32, i32) {
    %c0_i32 = arith.constant 0 : i32
    %c0_i32_0 = arith.constant 0 : i32
    %c0_i32_1 = arith.constant 0 : i32
    %c0_i32_2 = arith.constant 0 : i32
    return %c0_i32, %c0_i32_0, %c0_i32_1 : i32, i32, i32
  }
  func.func @transform_4(%arg0: i32) -> (i32, i32, i32) {
    %c0_i32 = arith.constant 0 : i32
    %c0_i32_0 = arith.constant 0 : i32
    %c0_i32_1 = arith.constant 0 : i32
    %c0_i32_2 = arith.constant 0 : i32
    return %c0_i32, %c0_i32_0, %c0_i32_1 : i32, i32, i32
  }
  func.func @transform_5(%arg0: i32) -> (i32, i32, i32) {
    %c0_i32 = arith.constant 0 : i32
    %c0_i32_0 = arith.constant 0 : i32
    %c0_i32_1 = arith.constant 0 : i32
    %c0_i32_2 = arith.constant 0 : i32
    return %c0_i32, %c0_i32_0, %c0_i32_1 : i32, i32, i32
  }
  func.func @transform_6(%arg0: i32) -> (i32, i32) {
    %c0_i32 = arith.constant 0 : i32
    %c0_i32_0 = arith.constant 0 : i32
    return %arg0, %c0_i32 : i32, i32
  }
}

</mosaic_0001>

<llo_original>
// kernel: fnn_user_embedding.1
$region0: #{fnn_user_embedding.1}
  #allocation0 [shape = 'u32[]', space=smem, size = 0x4, offset = 0x4, fixed_abs, tag = 'smem constant byte address 0x4 - core index']
  #allocation1 [shape = 'u32[144,128]{1,0:T(1,128)}', space=vmem, size = 0x12000, scoped, tag = 'internal scratch']
  %s0 = inlined_call_operand.vmem [shape: s32[2,1], index: 0, kind: input, shape index: {}]
  %s1 = inlined_call_operand.vmem [shape: f32[2,8,128], index: 1, kind: input, shape index: {}]
  %s2 = inlined_call_operand.vmem [shape: f32[2,8,128], index: 2, kind: input, shape index: {}]
  %s3 = inlined_call_operand.vmem [shape: f32[2,128,128], index: 3, kind: input, shape index: {}]
  %s4 = inlined_call_operand.vmem [shape: f32[2,1,128], index: 4, kind: input, shape index: {}]
  %s5 = inlined_call_operand.vmem [shape: f32[2,128,128], index: 5, kind: input, shape index: {}]
  %s6 = inlined_call_operand.hbm [shape: f32[2,128], index: 6, kind: output, shape index: {}]
  %s7 = sld [smem:[#allocation0]]
  $region34: #{fnn_user_embedding.1} parent=0
    _
  %s9 = ssub.s32 1, %s7
  %s10 = scalar_select 0, %s9, %s7
  $region1: #{fnn_user_embedding.1} parent=0
    #allocation2 [shape = 'u8[1024]{0}', space=vmem, size = 0x400, scoped, tag = 'output window, operand 0, single buffered']
    #allocation3 [shape = 's32[1]{0}', space=sflag, size = 0x4, scoped, tag = 'scoped memory for fnn_user_embedding.1']
    %11 = vsyncpa [#allocation3], 0
    // Predicated region
    $region2: #{fnn_user_embedding.1} parent=1 // pred_check
      _
    $region3: #{fnn_user_embedding.1} parent=1 // pred_check_branch
      %13 = sbr.rel (0) target = $region5
    $region4: #{fnn_user_embedding.1} parent=1 // pred_region
      _
    $region5: #{fnn_user_embedding.1} parent=1 // pred_fallthru
      _
    // Predicated region
    $region6: #{fnn_user_embedding.1} parent=1 // pred_check
      _
    $region7: #{fnn_user_embedding.1} parent=1 // pred_check_branch
      %15 = sbr.rel (0) target = $region9
    $region8: #{fnn_user_embedding.1} parent=1 // pred_region
      _
    $region9: #{fnn_user_embedding.1} parent=1 // pred_fallthru
      _
    // Predicated region
    $region10: #{fnn_user_embedding.1} parent=1 // pred_check
      _
    $region11: #{fnn_user_embedding.1} parent=1 // pred_check_branch
      %17 = sbr.rel (0) target = $region13
    $region12: #{fnn_user_embedding.1} parent=1 // pred_region
      _
    $region13: #{fnn_user_embedding.1} parent=1 // pred_fallthru
      _
    // Predicated region
    $region14: #{fnn_user_embedding.1} parent=1 // pred_check
      _
    $region15: #{fnn_user_embedding.1} parent=1 // pred_check_branch
      %19 = sbr.rel (0) target = $region17
    $region16: #{fnn_user_embedding.1} parent=1 // pred_region
      _
    $region17: #{fnn_user_embedding.1} parent=1 // pred_fallthru
      _
    // Predicated region
    $region18: #{fnn_user_embedding.1} parent=1 // pred_check
      _
    $region19: #{fnn_user_embedding.1} parent=1 // pred_check_branch
      %21 = sbr.rel (0) target = $region21
    $region20: #{fnn_user_embedding.1} parent=1 // pred_region
      _
    $region21: #{fnn_user_embedding.1} parent=1 // pred_fallthru
      _
    // Predicated region
    $region22: #{fnn_user_embedding.1} parent=1 // pred_check
      _
    $region23: #{fnn_user_embedding.1} parent=1 // pred_check_branch
      %23 = sbr.rel (0) target = $region25
    $region24: #{fnn_user_embedding.1} parent=1 // pred_region
      _
    $region25: #{fnn_user_embedding.1} parent=1 // pred_fallthru
      _
    %v24 = vld [vmem:[%s1] sm:$0xff]
    %v25 = vld [vmem:[%s1 + $0x8] sm:$0xff]
    %v26 = vlaneseq
    %v27 = vshrl.u32 %v26, 7
    %v28 = vld [vmem:[%s0] sm:$0x3]
    %v30 = vunpack.c.l.s4 1966171168
    %v31 = vunpack.c.0.s8 %v30
    %v32 = vlaneseq
    %v33 = vshrl.u32 %v32, 7
    %v34 = vsub.s32 %v31, %v33
    %v35 = vrot.slane %v28, %v34
    %v36 = vcombine.high %v35, %v35
    %v38 = vunpack.c.l.s4 1966171168
    %v39 = vunpack.c.0.s8 %v38
    %v40 = vlaneseq
    %v41 = vshrl.u32 %v40, 7
    %v42 = vsub.s32 %v39, %v41
    %v43 = vrot.slane %v35, %v42
    %v45 = vunpack.c.l.s4 1966171168
    %v46 = vunpack.c.0.s8 %v45
    %v47 = vlaneseq
    %v48 = vshrl.u32 %v47, 7
    %v49 = vsub.s32 %v46, %v48
    %v50 = vrot.slane %v36, %v49
    %v51 = vlaneseq
    %v52 = vshrl.u32 %v51, 7
    %v53 = vsub.s32 0, %v52
    %v54 = vrot.slane %v43, %v53
    %v55 = vlaneseq
    %v56 = vshrl.u32 %v55, 7
    %v57 = vsub.s32 0, %v56
    %v58 = vrot.slane %v50, %v57
    %vm59 = vcmp.lt.s32.totalorder %v27, %v54
    %vm60 = vcmp.lt.s32.totalorder %v27, %v58
    %v61 = vsel %vm59, 1, 0
    %v62 = vsel %vm60, 1, 0
    %v63 = vcvt.s32.f32 %v61
    %v64 = vcvt.s32.f32 %v62
    %v65 = vld [vmem:[%s2] sm:$0xff]
    %v66 = vlaneseq
    %v67 = vshrl.u32 %v66, 7
    %v68 = vsub.s32 0, %v67
    %v69 = vrot.slane %v65, %v68
    %v70 = vmul.f32 %v24, %v69
    %v71 = vmul.f32 %v25, %v69
    %72 = vadd.xlane.f32.xlu0 %v70
    %v73 = vpop.xlane.xlu0 %72
    %74 = vadd.xlane.f32.xlu0 %v71
    %v75 = vpop.xlane.xlu0 %74
    %v76 = vsel %vm59, %v73, -1e+30
    %v77 = vsel %vm60, %v75, -1e+30
    %vm78 = vcmask 7168
    %v79 = vsel %vm78, %v76, -inf
    %v80 = vrot.slane %v79, 4
    %v81 = vmax.f32 %v79, %v80
    %v82 = vrot.slane %v81, 2
    %v83 = vmax.f32 %v81, %v82
    %v84 = vrot.slane %v83, 1
    %v85 = vmax.f32 %v83, %v84
    %v86 = vsel %vm78, %v77, -inf
    %v87 = vrot.slane %v86, 4
    %v88 = vmax.f32 %v86, %v87
    %v89 = vrot.slane %v88, 2
    %v90 = vmax.f32 %v88, %v89
    %v91 = vrot.slane %v90, 1
    %v92 = vmax.f32 %v90, %v91
    %v93 = vsub.f32 %v76, %v85
    %v94 = vsub.f32 %v77, %v92
    %v95 = vmul.f32 %v93, 1.442695
    %v96 = vpow.pop %v95
    %v97 = vmul.f32 %v94, 1.442695
    %v98 = vpow.pop %v97
    %v99 = vmul.f32 %v96, %v63
    %v100 = vmul.f32 %v98, %v64
    %v101 = vsel %vm78, %v99, 0.0
    %v102 = vrot.slane %v101, 4
    %v103 = vadd.f32 %v101, %v102
    %v104 = vrot.slane %v103, 2
    %v105 = vadd.f32 %v103, %v104
    %v106 = vrot.slane %v105, 1
    %v107 = vadd.f32 %v105, %v106
    %v108 = vsel %vm78, %v100, 0.0
    %v109 = vrot.slane %v108, 4
    %v110 = vadd.f32 %v108, %v109
    %v111 = vrot.slane %v110, 2
    %v112 = vadd.f32 %v110, %v111
    %v113 = vrot.slane %v112, 1
    %v114 = vadd.f32 %v112, %v113
    %v115 = vmax.f32 %v107, 1e-30
    %v116 = vmax.f32 %v114, 1e-30
    %v117 = vrcp.pop %v115
    %v118 = vrcp.pop %v116
    %v119 = vmul.f32 %v115, %v117
    %v120 = vmul.f32 %v116, %v118
    %v121 = vsub.f32 2.0, %v119
    %v122 = vsub.f32 2.0, %v120
    %v123 = vmul.f32 %v117, %v121
    %v124 = vmul.f32 %v118, %v122
    %v125 = vmul.f32 %v99, %v123
    %v126 = vmul.f32 %v100, %v124
    %128 = vset.pattern.permute.xlu0 0
    %129 = vperm.xlu0 %128, %v125
    %v130 = vpop.permute.xlu0 %129
    %133 = vset.pattern.permute.xlu0 0
    %134 = vperm.xlu0 %133, %v126
    %v135 = vpop.permute.xlu0 %134
    %v137 = vmul.f32 %v130, %v24
    %v138 = vmul.f32 %v135, %v25
    %v139 = vadd.f32 %v24, %v137
    %v140 = vadd.f32 %v25, %v138
    %141 = vadd.xlane.f32.xlu0 %v139
    %v142 = vpop.xlane.xlu0 %141
    %143 = vadd.xlane.f32.xlu0 %v140
    %v144 = vpop.xlane.xlu0 %143
    %v145 = vmul.f32 %v142, 0.03125
    %v146 = vmul.f32 %v144, 0.03125
    %v147 = vmul.f32 %v139, %v139
    %v148 = vmul.f32 %v140, %v140
    %149 = vadd.xlane.f32.xlu0 %v147
    %v150 = vpop.xlane.xlu0 %149
    %151 = vadd.xlane.f32.xlu0 %v148
    %v152 = vpop.xlane.xlu0 %151
    %v153 = vmul.f32 %v150, 0.03125
    %v154 = vmul.f32 %v152, 0.03125
    %v155 = vmul.f32 %v145, %v145
    %v156 = vmul.f32 %v146, %v146
    %v157 = vsub.f32 %v153, %v155
    %v158 = vsub.f32 %v154, %v156
    %v159 = vmax.f32 %v157, 0.0
    %v160 = vmax.f32 %v158, 0.0
    %v161 = vsub.f32 %v139, %v145
    %v162 = vsub.f32 %v140, %v146
    %v163 = vadd.f32 %v159, 1e-05
    %v164 = vadd.f32 %v160, 1e-05
    %v165 = vrsqrt.pop %v163
    %v166 = vrsqrt.pop %v164
    %v167 = vmul.f32 %v161, %v165
    %v168 = vmul.f32 %v162, %v166
    %v169 = vlaneseq
    %v170 = vshrl.u32 %v169, 7
    %v171 = vsub.s32 2, %v170
    %v172 = vrot.slane %v65, %v171
    %v173 = vmul.f32 %v167, %v172
    %v174 = vmul.f32 %v168, %v172
    %v175 = vlaneseq
    %v176 = vshrl.u32 %v175, 7
    %v177 = vsub.s32 3, %v176
    %v178 = vrot.slane %v65, %v177
    %v179 = vadd.f32 %v173, %v178
    %v180 = vadd.f32 %v174, %v178
    %v181 = vld [vmem:[%s3] sm:$0xff]
    %v182 = vld [vmem:[%s3 + $0x8] sm:$0xff]
    %v183 = vld [vmem:[%s3 + $0x10] sm:$0xff]
    %v184 = vld [vmem:[%s3 + $0x18] sm:$0xff]
    %v185 = vld [vmem:[%s3 + $0x20] sm:$0xff]
    %v186 = vld [vmem:[%s3 + $0x28] sm:$0xff]
    %v187 = vld [vmem:[%s3 + $0x30] sm:$0xff]
    %v188 = vld [vmem:[%s3 + $0x38] sm:$0xff]
    %v189 = vld [vmem:[%s3 + $0x40] sm:$0xff]
    %v190 = vld [vmem:[%s3 + $0x48] sm:$0xff]
    %v191 = vld [vmem:[%s3 + $0x50] sm:$0xff]
    %v192 = vld [vmem:[%s3 + $0x58] sm:$0xff]
    %v193 = vld [vmem:[%s3 + $0x60] sm:$0xff]
    %v194 = vld [vmem:[%s3 + $0x68] sm:$0xff]
    %v195 = vld [vmem:[%s3 + $0x70] sm:$0xff]
    %v196 = vld [vmem:[%s3 + $0x78] sm:$0xff]
    %v197 = vld [vmem:[%s4] sm:$0x1]
    %v199 = vlaneseq
    %v200 = vshrl.u32 %v199, 7
    %v201 = vsub.s32 0, %v200
    %v202 = vrot.slane %v197, %v201
    %204 = vmatprep.subr.mxu0 0.0
    %205 = vmatpush1.msra.mxu0 %v181
    %206 = vmatprep.subr.mxu0 0.0
    %207 = vmatpush1.msra.mxu0 %v182
    %208 = vmatprep.subr.mxu0 0.0
    %209 = vmatpush1.msra.mxu0 %v183
    %210 = vmatprep.subr.mxu0 0.0
    %211 = vmatpush1.msra.mxu0 %v184
    %212 = vmatprep.subr.mxu0 0.0
    %213 = vmatpush1.msra.mxu0 %v185
    %214 = vmatprep.subr.mxu0 0.0
    %215 = vmatpush1.msra.mxu0 %v186
    %216 = vmatprep.subr.mxu0 0.0
    %217 = vmatpush1.msra.mxu0 %v187
    %218 = vmatprep.subr.mxu0 0.0
    %219 = vmatpush1.msra.mxu0 %v188
    %220 = vmatprep.subr.mxu0 0.0
    %221 = vmatpush1.msra.mxu0 %v189
    %222 = vmatprep.subr.mxu0 0.0
    %223 = vmatpush1.msra.mxu0 %v190
    %224 = vmatprep.subr.mxu0 0.0
    %225 = vmatpush1.msra.mxu0 %v191
    %226 = vmatprep.subr.mxu0 0.0
    %227 = vmatpush1.msra.mxu0 %v192
    %228 = vmatprep.subr.mxu0 0.0
    %229 = vmatpush1.msra.mxu0 %v193
    %230 = vmatprep.subr.mxu0 0.0
    %231 = vmatpush1.msra.mxu0 %v194
    %232 = vmatprep.subr.mxu0 0.0
    %233 = vmatpush1.msra.mxu0 %v195
    %234 = vmatprep.subr.mxu0 0.0
    %235 = vmatpush1.msra.mxu0 %v196
    %236 = vmatprep.subr.mxu0 0.0
    %237 = vmatpush1.msra.mxu0 0.0
    %238 = vmatprep.subr.mxu0 0.0
    %239 = vmatpush1.msra.mxu0 0.0
    %240 = vmatprep.subr.mxu0 0.0
    %241 = vmatpush1.msra.mxu0 0.0
    %242 = vmatprep.subr.mxu0 0.0
    %243 = vmatpush1.msra.mxu0 0.0
    %244 = vmatprep.subr.mxu0 0.0
    %245 = vmatpush1.msra.mxu0 0.0
    %246 = vmatprep.subr.mxu0 0.0
    %247 = vmatpush1.msra.mxu0 0.0
    %248 = vmatprep.subr.mxu0 0.0
    %249 = vmatpush1.msra.mxu0 0.0
    %250 = vmatprep.subr.mxu0 0.0
    %251 = vmatpush1.msra.mxu0 0.0
    %252 = vmatprep.subr.mxu0 0.0
    %253 = vmatpush1.msra.mxu0 0.0
    %254 = vmatprep.subr.mxu0 0.0
    %255 = vmatpush1.msra.mxu0 0.0
    %256 = vmatprep.subr.mxu0 0.0
    %257 = vmatpush1.msra.mxu0 0.0
    %258 = vmatprep.subr.mxu0 0.0
    %259 = vmatpush1.msra.mxu0 0.0
    %260 = vmatprep.subr.mxu0 0.0
    %261 = vmatpush1.msra.mxu0 0.0
    %262 = vmatprep.subr.mxu0 0.0
    %263 = vmatpush1.msra.mxu0 0.0
    %264 = vmatprep.subr.mxu0 0.0
    %265 = vmatpush1.msra.mxu0 0.0
    %266 = vmatprep.subr.mxu0 0.0
    %267 = vmatpush1.msra.mxu0 0.0
    %268 = vmatprep.mubr.f32.mxu0 0.0
    %269 = vmatmul.mubr.f32.gmra.mrb[0].mxu0 %v179
    %v270 = vpop.f32.mrb[0].mxu0
    %v271 = vadd.f32 %v202, %v270
    %v272 = vpop.f32.mrb[0].mxu0
    %273 = vmatprep.mubr.f32.mxu0 0.0
    %274 = vmatmul.mubr.f32.gmra.mrb[0].mxu0 %v180
    %v275 = vpop.f32.mrb[0].mxu0
    %v276 = vadd.f32 %v202, %v275
    %v277 = vpop.f32.mrb[0].mxu0
    %278 = vdwg.mxu0
    %v279 = vmax.f32 %v271, 0.0
    %v280 = vmax.f32 %v276, 0.0
    %v281 = vld [vmem:[%s5] sm:$0xff]
    %v282 = vld [vmem:[%s5 + $0x8] sm:$0xff]
    %v283 = vld [vmem:[%s5 + $0x10] sm:$0xff]
    %v284 = vld [vmem:[%s5 + $0x18] sm:$0xff]
    %v285 = vld [vmem:[%s5 + $0x20] sm:$0xff]
    %v286 = vld [vmem:[%s5 + $0x28] sm:$0xff]
    %v287 = vld [vmem:[%s5 + $0x30] sm:$0xff]
    %v288 = vld [vmem:[%s5 + $0x38] sm:$0xff]
    %v289 = vld [vmem:[%s5 + $0x40] sm:$0xff]
    %v290 = vld [vmem:[%s5 + $0x48] sm:$0xff]
    %v291 = vld [vmem:[%s5 + $0x50] sm:$0xff]
    %v292 = vld [vmem:[%s5 + $0x58] sm:$0xff]
    %v293 = vld [vmem:[%s5 + $0x60] sm:$0xff]
    %v294 = vld [vmem:[%s5 + $0x68] sm:$0xff]
    %v295 = vld [vmem:[%s5 + $0x70] sm:$0xff]
    %v296 = vld [vmem:[%s5 + $0x78] sm:$0xff]
    %v297 = vlaneseq
    %v298 = vshrl.u32 %v297, 7
    %v299 = vsub.s32 1, %v298
    %v300 = vrot.slane %v65, %v299
    %301 = vmatprep.subr.mxu0 0.0
    %302 = vmatpush1.msra.mxu0 %v281
    %303 = vmatprep.subr.mxu0 0.0
    %304 = vmatpush1.msra.mxu0 %v282
    %305 = vmatprep.subr.mxu0 0.0
    %306 = vmatpush1.msra.mxu0 %v283
    %307 = vmatprep.subr.mxu0 0.0
    %308 = vmatpush1.msra.mxu0 %v284
    %309 = vmatprep.subr.mxu0 0.0
    %310 = vmatpush1.msra.mxu0 %v285
    %311 = vmatprep.subr.mxu0 0.0
    %312 = vmatpush1.msra.mxu0 %v286
    %313 = vmatprep.subr.mxu0 0.0
    %314 = vmatpush1.msra.mxu0 %v287
    %315 = vmatprep.subr.mxu0 0.0
    %316 = vmatpush1.msra.mxu0 %v288
    %317 = vmatprep.subr.mxu0 0.0
    %318 = vmatpush1.msra.mxu0 %v289
    %319 = vmatprep.subr.mxu0 0.0
    %320 = vmatpush1.msra.mxu0 %v290
    %321 = vmatprep.subr.mxu0 0.0
    %322 = vmatpush1.msra.mxu0 %v291
    %323 = vmatprep.subr.mxu0 0.0
    %324 = vmatpush1.msra.mxu0 %v292
    %325 = vmatprep.subr.mxu0 0.0
    %326 = vmatpush1.msra.mxu0 %v293
    %327 = vmatprep.subr.mxu0 0.0
    %328 = vmatpush1.msra.mxu0 %v294
    %329 = vmatprep.subr.mxu0 0.0
    %330 = vmatpush1.msra.mxu0 %v295
    %331 = vmatprep.subr.mxu0 0.0
    %332 = vmatpush1.msra.mxu0 %v296
    %333 = vmatprep.subr.mxu0 0.0
    %334 = vmatpush1.msra.mxu0 0.0
    %335 = vmatprep.subr.mxu0 0.0
    %336 = vmatpush1.msra.mxu0 0.0
    %337 = vmatprep.subr.mxu0 0.0
    %338 = vmatpush1.msra.mxu0 0.0
    %339 = vmatprep.subr.mxu0 0.0
    %340 = vmatpush1.msra.mxu0 0.0
    %341 = vmatprep.subr.mxu0 0.0
    %342 = vmatpush1.msra.mxu0 0.0
    %343 = vmatprep.subr.mxu0 0.0
    %344 = vmatpush1.msra.mxu0 0.0
    %345 = vmatprep.subr.mxu0 0.0
    %346 = vmatpush1.msra.mxu0 0.0
    %347 = vmatprep.subr.mxu0 0.0
    %348 = vmatpush1.msra.mxu0 0.0
    %349 = vmatprep.subr.mxu0 0.0
    %350 = vmatpush1.msra.mxu0 0.0
    %351 = vmatprep.subr.mxu0 0.0
    %352 = vmatpush1.msra.mxu0 0.0
    %353 = vmatprep.subr.mxu0 0.0
    %354 = vmatpush1.msra.mxu0 0.0
    %355 = vmatprep.subr.mxu0 0.0
    %356 = vmatpush1.msra.mxu0 0.0
    %357 = vmatprep.subr.mxu0 0.0
    %358 = vmatpush1.msra.mxu0 0.0
    %359 = vmatprep.subr.mxu0 0.0
    %360 = vmatpush1.msra.mxu0 0.0
    %361 = vmatprep.subr.mxu0 0.0
    %362 = vmatpush1.msra.mxu0 0.0
    %363 = vmatprep.subr.mxu0 0.0
    %364 = vmatpush1.msra.mxu0 0.0
    %365 = vmatprep.mubr.f32.mxu0 0.0
    %366 = vmatmul.mubr.f32.gmra.mrb[0].mxu0 %v279
    %v367 = vpop.f32.mrb[0].mxu0
    %v368 = vadd.f32 %v300, %v367
    %v369 = vpop.f32.mrb[0].mxu0
    %370 = vmatprep.mubr.f32.mxu0 0.0
    %371 = vmatmul.mubr.f32.gmra.mrb[0].mxu0 %v280
    %v372 = vpop.f32.mrb[0].mxu0
    %v373 = vadd.f32 %v300, %v372
    %v374 = vpop.f32.mrb[0].mxu0
    %375 = vdwg.mxu0
    %v376 = vadd.f32 %v179, %v368
    %v377 = vadd.f32 %v180, %v373
    %378 = vadd.xlane.f32.xlu0 %v376
    %v379 = vpop.xlane.xlu0 %378
    %380 = vadd.xlane.f32.xlu0 %v377
    %v381 = vpop.xlane.xlu0 %380
    %v382 = vmul.f32 %v379, 0.03125
    %v383 = vmul.f32 %v381, 0.03125
    %v384 = vmul.f32 %v376, %v376
    %v385 = vmul.f32 %v377, %v377
    %386 = vadd.xlane.f32.xlu0 %v384
    %v387 = vpop.xlane.xlu0 %386
    %388 = vadd.xlane.f32.xlu0 %v385
    %v389 = vpop.xlane.xlu0 %388
    %v390 = vmul.f32 %v387, 0.03125
    %v391 = vmul.f32 %v389, 0.03125
    %v392 = vmul.f32 %v382, %v382
    %v393 = vmul.f32 %v383, %v383
    %v394 = vsub.f32 %v390, %v392
    %v395 = vsub.f32 %v391, %v393
    %v396 = vmax.f32 %v394, 0.0
    %v397 = vmax.f32 %v395, 0.0
    %v398 = vsub.f32 %v376, %v382
    %v399 = vsub.f32 %v377, %v383
    %v400 = vadd.f32 %v396, 1e-05
    %v401 = vadd.f32 %v397, 1e-05
    %v402 = vrsqrt.pop %v400
    %v403 = vrsqrt.pop %v401
    %v404 = vmul.f32 %v398, %v402
    %v405 = vmul.f32 %v399, %v403
    %v406 = vlaneseq
    %v407 = vshrl.u32 %v406, 7
    %v408 = vsub.s32 4, %v407
    %v409 = vrot.slane %v65, %v408
    %v410 = vmul.f32 %v404, %v409
    %v411 = vmul.f32 %v405, %v409
    %v412 = vlaneseq
    %v413 = vshrl.u32 %v412, 7
    %v414 = vsub.s32 5, %v413
    %v415 = vrot.slane %v65, %v414
    %v416 = vadd.f32 %v410, %v415
    %v417 = vadd.f32 %v411, %v415
    %419 = vset.pattern.permute.xlu0 0
    %420 = vperm.xlu0 %419, %v63
    %v421 = vpop.permute.xlu0 %420
    %424 = vset.pattern.permute.xlu0 0
    %425 = vperm.xlu0 %424, %v64
    %v426 = vpop.permute.xlu0 %425
    %v428 = vmul.f32 %v416, %v421
    %v429 = vmul.f32 %v417, %v426
    %s430 = scalar_lea.vmem %s2, 8
    %v431 = vld [vmem:[%s430] sm:$0xff]
    %v432 = vlaneseq
    %v433 = vshrl.u32 %v432, 7
    %v434 = vsub.s32 0, %v433
    %v435 = vrot.slane %v431, %v434
    %v436 = vmul.f32 %v428, %v435
    %v437 = vmul.f32 %v429, %v435
    %438 = vadd.xlane.f32.xlu0 %v436
    %v439 = vpop.xlane.xlu0 %438
    %440 = vadd.xlane.f32.xlu0 %v437
    %v441 = vpop.xlane.xlu0 %440
    %v442 = vsel %vm59, %v439, -1e+30
    %v443 = vsel %vm60, %v441, -1e+30
    %v444 = vsel %vm78, %v442, -inf
    %v445 = vrot.slane %v444, 4
    %v446 = vmax.f32 %v444, %v445
    %v447 = vrot.slane %v446, 2
    %v448 = vmax.f32 %v446, %v447
    %v449 = vrot.slane %v448, 1
    %v450 = vmax.f32 %v448, %v449
    %v451 = vsel %vm78, %v443, -inf
    %v452 = vrot.slane %v451, 4
    %v453 = vmax.f32 %v451, %v452
    %v454 = vrot.slane %v453, 2
    %v455 = vmax.f32 %v453, %v454
    %v456 = vrot.slane %v455, 1
    %v457 = vmax.f32 %v455, %v456
    %v458 = vsub.f32 %v442, %v450
    %v459 = vsub.f32 %v443, %v457
    %v460 = vmul.f32 %v458, 1.442695
    %v461 = vpow.pop %v460
    %v462 = vmul.f32 %v459, 1.442695
    %v463 = vpow.pop %v462
    %v464 = vmul.f32 %v461, %v63
    %v465 = vmul.f32 %v463, %v64
    %v466 = vsel %vm78, %v464, 0.0
    %v467 = vrot.slane %v466, 4
    %v468 = vadd.f32 %v466, %v467
    %v469 = vrot.slane %v468, 2
    %v470 = vadd.f32 %v468, %v469
    %v471 = vrot.slane %v470, 1
    %v472 = vadd.f32 %v470, %v471
    %v473 = vsel %vm78, %v465, 0.0
    %v474 = vrot.slane %v473, 4
    %v475 = vadd.f32 %v473, %v474
    %v476 = vrot.slane %v475, 2
    %v477 = vadd.f32 %v475, %v476
    %v478 = vrot.slane %v477, 1
    %v479 = vadd.f32 %v477, %v478
    %v480 = vmax.f32 %v472, 1e-30
    %v481 = vmax.f32 %v479, 1e-30
    %v482 = vrcp.pop %v480
    %v483 = vrcp.pop %v481
    %v484 = vmul.f32 %v480, %v482
    %v485 = vmul.f32 %v481, %v483
    %v486 = vsub.f32 2.0, %v484
    %v487 = vsub.f32 2.0, %v485
    %v488 = vmul.f32 %v482, %v486
    %v489 = vmul.f32 %v483, %v487
    %v490 = vmul.f32 %v464, %v488
    %v491 = vmul.f32 %v465, %v489
    %493 = vset.pattern.permute.xlu0 0
    %494 = vperm.xlu0 %493, %v490
    %v495 = vpop.permute.xlu0 %494
    %498 = vset.pattern.permute.xlu0 0
    %499 = vperm.xlu0 %498, %v491
    %v500 = vpop.permute.xlu0 %499
    %v502 = vmul.f32 %v495, %v428
    %v503 = vmul.f32 %v500, %v429
    %v504 = vadd.f32 %v428, %v502
    %v505 = vadd.f32 %v429, %v503
    %506 = vadd.xlane.f32.xlu0 %v504
    %v507 = vpop.xlane.xlu0 %506
    %508 = vadd.xlane.f32.xlu0 %v505
    %v509 = vpop.xlane.xlu0 %508
    %v510 = vmul.f32 %v507, 0.03125
    %v511 = vmul.f32 %v509, 0.03125
    %v512 = vmul.f32 %v504, %v504
    %v513 = vmul.f32 %v505, %v505
    %514 = vadd.xlane.f32.xlu0 %v512
    %v515 = vpop.xlane.xlu0 %514
    %516 = vadd.xlane.f32.xlu0 %v513
    %v517 = vpop.xlane.xlu0 %516
    %v518 = vmul.f32 %v515, 0.03125
    %v519 = vmul.f32 %v517, 0.03125
    %v520 = vmul.f32 %v510, %v510
    %v521 = vmul.f32 %v511, %v511
    %v522 = vsub.f32 %v518, %v520
    %v523 = vsub.f32 %v519, %v521
    %v524 = vmax.f32 %v522, 0.0
    %v525 = vmax.f32 %v523, 0.0
    %v526 = vsub.f32 %v504, %v510
    %v527 = vsub.f32 %v505, %v511
    %v528 = vadd.f32 %v524, 1e-05
    %v529 = vadd.f32 %v525, 1e-05
    %v530 = vrsqrt.pop %v528
    %v531 = vrsqrt.pop %v529
    %v532 = vmul.f32 %v526, %v530
    %v533 = vmul.f32 %v527, %v531
    %v534 = vlaneseq
    %v535 = vshrl.u32 %v534, 7
    %v536 = vsub.s32 2, %v535
    %v537 = vrot.slane %v431, %v536
    %v538 = vmul.f32 %v532, %v537
    %v539 = vmul.f32 %v533, %v537
    %v540 = vlaneseq
    %v541 = vshrl.u32 %v540, 7
    %v542 = vsub.s32 3, %v541
    %v543 = vrot.slane %v431, %v542
    %v544 = vadd.f32 %v538, %v543
    %v545 = vadd.f32 %v539, %v543
    %s546 = scalar_lea.vmem %s3, 128
    %v547 = vld [vmem:[%s546] sm:$0xff]
    %v548 = vld [vmem:[%s546 + $0x8] sm:$0xff]
    %v549 = vld [vmem:[%s546 + $0x10] sm:$0xff]
    %v550 = vld [vmem:[%s546 + $0x18] sm:$0xff]
    %v551 = vld [vmem:[%s546 + $0x20] sm:$0xff]
    %v552 = vld [vmem:[%s546 + $0x28] sm:$0xff]
    %v553 = vld [vmem:[%s546 + $0x30] sm:$0xff]
    %v554 = vld [vmem:[%s546 + $0x38] sm:$0xff]
    %v555 = vld [vmem:[%s546 + $0x40] sm:$0xff]
    %v556 = vld [vmem:[%s546 + $0x48] sm:$0xff]
    %v557 = vld [vmem:[%s546 + $0x50] sm:$0xff]
    %v558 = vld [vmem:[%s546 + $0x58] sm:$0xff]
    %v559 = vld [vmem:[%s546 + $0x60] sm:$0xff]
    %v560 = vld [vmem:[%s546 + $0x68] sm:$0xff]
    %v561 = vld [vmem:[%s546 + $0x70] sm:$0xff]
    %v562 = vld [vmem:[%s546 + $0x78] sm:$0xff]
    %s563 = scalar_lea.vmem %s4, 1
    %v564 = vld [vmem:[%s563] sm:$0x1]
    %v566 = vlaneseq
    %v567 = vshrl.u32 %v566, 7
    %v568 = vsub.s32 0, %v567
    %v569 = vrot.slane %v564, %v568
    %571 = vmatprep.subr.mxu0 0.0
    %572 = vmatpush1.msra.mxu0 %v547
    %573 = vmatprep.subr.mxu0 0.0
    %574 = vmatpush1.msra.mxu0 %v548
    %575 = vmatprep.subr.mxu0 0.0
    %576 = vmatpush1.msra.mxu0 %v549
    %577 = vmatprep.subr.mxu0 0.0
    %578 = vmatpush1.msra.mxu0 %v550
    %579 = vmatprep.subr.mxu0 0.0
    %580 = vmatpush1.msra.mxu0 %v551
    %581 = vmatprep.subr.mxu0 0.0
    %582 = vmatpush1.msra.mxu0 %v552
    %583 = vmatprep.subr.mxu0 0.0
    %584 = vmatpush1.msra.mxu0 %v553
    %585 = vmatprep.subr.mxu0 0.0
    %586 = vmatpush1.msra.mxu0 %v554
    %587 = vmatprep.subr.mxu0 0.0
    %588 = vmatpush1.msra.mxu0 %v555
    %589 = vmatprep.subr.mxu0 0.0
    %590 = vmatpush1.msra.mxu0 %v556
    %591 = vmatprep.subr.mxu0 0.0
    %592 = vmatpush1.msra.mxu0 %v557
    %593 = vmatprep.subr.mxu0 0.0
    %594 = vmatpush1.msra.mxu0 %v558
    %595 = vmatprep.subr.mxu0 0.0
    %596 = vmatpush1.msra.mxu0 %v559
    %597 = vmatprep.subr.mxu0 0.0
    %598 = vmatpush1.msra.mxu0 %v560
    %599 = vmatprep.subr.mxu0 0.0
    %600 = vmatpush1.msra.mxu0 %v561
    %601 = vmatprep.subr.mxu0 0.0
    %602 = vmatpush1.msra.mxu0 %v562
    %603 = vmatprep.subr.mxu0 0.0
    %604 = vmatpush1.msra.mxu0 0.0
    %605 = vmatprep.subr.mxu0 0.0
    %606 = vmatpush1.msra.mxu0 0.0
    %607 = vmatprep.subr.mxu0 0.0
    %608 = vmatpush1.msra.mxu0 0.0
    %609 = vmatprep.subr.mxu0 0.0
    %610 = vmatpush1.msra.mxu0 0.0
    %611 = vmatprep.subr.mxu0 0.0
    %612 = vmatpush1.msra.mxu0 0.0
    %613 = vmatprep.subr.mxu0 0.0
    %614 = vmatpush1.msra.mxu0 0.0
    %615 = vmatprep.subr.mxu0 0.0
    %616 = vmatpush1.msra.mxu0 0.0
    %617 = vmatprep.subr.mxu0 0.0
    %618 = vmatpush1.msra.mxu0 0.0
    %619 = vmatprep.subr.mxu0 0.0
    %620 = vmatpush1.msra.mxu0 0.0
    %621 = vmatprep.subr.mxu0 0.0
    %622 = vmatpush1.msra.mxu0 0.0
    %623 = vmatprep.subr.mxu0 0.0
    %624 = vmatpush1.msra.mxu0 0.0
    %625 = vmatprep.subr.mxu0 0.0
    %626 = vmatpush1.msra.mxu0 0.0
    %627 = vmatprep.subr.mxu0 0.0
    %628 = vmatpush1.msra.mxu0 0.0
    %629 = vmatprep.subr.mxu0 0.0
    %630 = vmatpush1.msra.mxu0 0.0
    %631 = vmatprep.subr.mxu0 0.0
    %632 = vmatpush1.msra.mxu0 0.0
    %633 = vmatprep.subr.mxu0 0.0
    %634 = vmatpush1.msra.mxu0 0.0
    %635 = vmatprep.mubr.f32.mxu0 0.0
    %636 = vmatmul.mubr.f32.gmra.mrb[0].mxu0 %v544
    %v637 = vpop.f32.mrb[0].mxu0
    %v638 = vadd.f32 %v569, %v637
    %v639 = vpop.f32.mrb[0].mxu0
    %640 = vmatprep.mubr.f32.mxu0 0.0
    %641 = vmatmul.mubr.f32.gmra.mrb[0].mxu0 %v545
    %v642 = vpop.f32.mrb[0].mxu0
    %v643 = vadd.f32 %v569, %v642
    %v644 = vpop.f32.mrb[0].mxu0
    %645 = vdwg.mxu0
    %v646 = vmax.f32 %v638, 0.0
    %v647 = vmax.f32 %v643, 0.0
    %s648 = scalar_lea.vmem %s5, 128
    %v649 = vld [vmem:[%s648] sm:$0xff]
    %v650 = vld [vmem:[%s648 + $0x8] sm:$0xff]
    %v651 = vld [vmem:[%s648 + $0x10] sm:$0xff]
    %v652 = vld [vmem:[%s648 + $0x18] sm:$0xff]
    %v653 = vld [vmem:[%s648 + $0x20] sm:$0xff]
    %v654 = vld [vmem:[%s648 + $0x28] sm:$0xff]
    %v655 = vld [vmem:[%s648 + $0x30] sm:$0xff]
    %v656 = vld [vmem:[%s648 + $0x38] sm:$0xff]
    %v657 = vld [vmem:[%s648 + $0x40] sm:$0xff]
    %v658 = vld [vmem:[%s648 + $0x48] sm:$0xff]
    %v659 = vld [vmem:[%s648 + $0x50] sm:$0xff]
    %v660 = vld [vmem:[%s648 + $0x58] sm:$0xff]
    %v661 = vld [vmem:[%s648 + $0x60] sm:$0xff]
    %v662 = vld [vmem:[%s648 + $0x68] sm:$0xff]
    %v663 = vld [vmem:[%s648 + $0x70] sm:$0xff]
    %v664 = vld [vmem:[%s648 + $0x78] sm:$0xff]
    %v665 = vlaneseq
    %v666 = vshrl.u32 %v665, 7
    %v667 = vsub.s32 1, %v666
    %v668 = vrot.slane %v431, %v667
    %669 = vmatprep.subr.mxu0 0.0
    %670 = vmatpush1.msra.mxu0 %v649
    %671 = vmatprep.subr.mxu0 0.0
    %672 = vmatpush1.msra.mxu0 %v650
    %673 = vmatprep.subr.mxu0 0.0
    %674 = vmatpush1.msra.mxu0 %v651
    %675 = vmatprep.subr.mxu0 0.0
    %676 = vmatpush1.msra.mxu0 %v652
    %677 = vmatprep.subr.mxu0 0.0
    %678 = vmatpush1.msra.mxu0 %v653
    %679 = vmatprep.subr.mxu0 0.0
    %680 = vmatpush1.msra.mxu0 %v654
    %681 = vmatprep.subr.mxu0 0.0
    %682 = vmatpush1.msra.mxu0 %v655
    %683 = vmatprep.subr.mxu0 0.0
    %684 = vmatpush1.msra.mxu0 %v656
    %685 = vmatprep.subr.mxu0 0.0
    %686 = vmatpush1.msra.mxu0 %v657
    %687 = vmatprep.subr.mxu0 0.0
    %688 = vmatpush1.msra.mxu0 %v658
    %689 = vmatprep.subr.mxu0 0.0
    %690 = vmatpush1.msra.mxu0 %v659
    %691 = vmatprep.subr.mxu0 0.0
    %692 = vmatpush1.msra.mxu0 %v660
    %693 = vmatprep.subr.mxu0 0.0
    %694 = vmatpush1.msra.mxu0 %v661
    %695 = vmatprep.subr.mxu0 0.0
    %696 = vmatpush1.msra.mxu0 %v662
    %697 = vmatprep.subr.mxu0 0.0
    %698 = vmatpush1.msra.mxu0 %v663
    %699 = vmatprep.subr.mxu0 0.0
    %700 = vmatpush1.msra.mxu0 %v664
    %701 = vmatprep.subr.mxu0 0.0
    %702 = vmatpush1.msra.mxu0 0.0
    %703 = vmatprep.subr.mxu0 0.0
    %704 = vmatpush1.msra.mxu0 0.0
    %705 = vmatprep.subr.mxu0 0.0
    %706 = vmatpush1.msra.mxu0 0.0
    %707 = vmatprep.subr.mxu0 0.0
    %708 = vmatpush1.msra.mxu0 0.0
    %709 = vmatprep.subr.mxu0 0.0
    %710 = vmatpush1.msra.mxu0 0.0
    %711 = vmatprep.subr.mxu0 0.0
    %712 = vmatpush1.msra.mxu0 0.0
    %713 = vmatprep.subr.mxu0 0.0
    %714 = vmatpush1.msra.mxu0 0.0
    %715 = vmatprep.subr.mxu0 0.0
    %716 = vmatpush1.msra.mxu0 0.0
    %717 = vmatprep.subr.mxu0 0.0
    %718 = vmatpush1.msra.mxu0 0.0
    %719 = vmatprep.subr.mxu0 0.0
    %720 = vmatpush1.msra.mxu0 0.0
    %721 = vmatprep.subr.mxu0 0.0
    %722 = vmatpush1.msra.mxu0 0.0
    %723 = vmatprep.subr.mxu0 0.0
    %724 = vmatpush1.msra.mxu0 0.0
    %725 = vmatprep.subr.mxu0 0.0
    %726 = vmatpush1.msra.mxu0 0.0
    %727 = vmatprep.subr.mxu0 0.0
    %728 = vmatpush1.msra.mxu0 0.0
    %729 = vmatprep.subr.mxu0 0.0
    %730 = vmatpush1.msra.mxu0 0.0
    %731 = vmatprep.subr.mxu0 0.0
    %732 = vmatpush1.msra.mxu0 0.0
    %733 = vmatprep.mubr.f32.mxu0 0.0
    %734 = vmatmul.mubr.f32.gmra.mrb[0].mxu0 %v646
    %v735 = vpop.f32.mrb[0].mxu0
    %v736 = vadd.f32 %v668, %v735
    %v737 = vpop.f32.mrb[0].mxu0
    %738 = vmatprep.mubr.f32.mxu0 0.0
    %739 = vmatmul.mubr.f32.gmra.mrb[0].mxu0 %v647
    %v740 = vpop.f32.mrb[0].mxu0
    %v741 = vadd.f32 %v668, %v740
    %v742 = vpop.f32.mrb[0].mxu0
    %743 = vdwg.mxu0
    %v744 = vadd.f32 %v544, %v736
    %v745 = vadd.f32 %v545, %v741
    %746 = vadd.xlane.f32.xlu0 %v744
    %v747 = vpop.xlane.xlu0 %746
    %748 = vadd.xlane.f32.xlu0 %v745
    %v749 = vpop.xlane.xlu0 %748
    %v750 = vmul.f32 %v747, 0.03125
    %v751 = vmul.f32 %v749, 0.03125
    %v752 = vmul.f32 %v744, %v744
    %v753 = vmul.f32 %v745, %v745
    %754 = vadd.xlane.f32.xlu0 %v752
    %v755 = vpop.xlane.xlu0 %754
    %756 = vadd.xlane.f32.xlu0 %v753
    %v757 = vpop.xlane.xlu0 %756
    %v758 = vmul.f32 %v755, 0.03125
    %v759 = vmul.f32 %v757, 0.03125
    %v760 = vmul.f32 %v750, %v750
    %v761 = vmul.f32 %v751, %v751
    %v762 = vsub.f32 %v758, %v760
    %v763 = vsub.f32 %v759, %v761
    %v764 = vmax.f32 %v762, 0.0
    %v765 = vmax.f32 %v763, 0.0
    %v766 = vsub.f32 %v744, %v750
    %v767 = vsub.f32 %v745, %v751
    %v768 = vadd.f32 %v764, 1e-05
    %v769 = vadd.f32 %v765, 1e-05
    %v770 = vrsqrt.pop %v768
    %v771 = vrsqrt.pop %v769
    %v772 = vmul.f32 %v766, %v770
    %v773 = vmul.f32 %v767, %v771
    %v774 = vlaneseq
    %v775 = vshrl.u32 %v774, 7
    %v776 = vsub.s32 4, %v775
    %v777 = vrot.slane %v431, %v776
    %v778 = vmul.f32 %v772, %v777
    %v779 = vmul.f32 %v773, %v777
    %v780 = vlaneseq
    %v781 = vshrl.u32 %v780, 7
    %v782 = vsub.s32 5, %v781
    %v783 = vrot.slane %v431, %v782
    %v784 = vadd.f32 %v778, %v783
    %v785 = vadd.f32 %v779, %v783
    %v786 = vmul.f32 %v784, %v421
    %v787 = vmul.f32 %v785, %v426
    %v788 = vlaneseq
    %v789 = vshrl.u32 %v788, 7
    %v790 = vsub.s32 6, %v789
    %v791 = vrot.slane %v65, %v790
    %v792 = vmul.f32 %v786, %v791
    %v793 = vmul.f32 %v787, %v791
    %794 = vadd.xlane.f32.xlu0 %v792
    %v795 = vpop.xlane.xlu0 %794
    %796 = vadd.xlane.f32.xlu0 %v793
    %v797 = vpop.xlane.xlu0 %796
    %v798 = vsel %vm59, %v795, -1e+30
    %v799 = vsel %vm60, %v797, -1e+30
    %v800 = vsel %vm78, %v798, -inf
    %v801 = vrot.slane %v800, 4
    %v802 = vmax.f32 %v800, %v801
    %v803 = vrot.slane %v802, 2
    %v804 = vmax.f32 %v802, %v803
    %v805 = vrot.slane %v804, 1
    %v806 = vmax.f32 %v804, %v805
    %v807 = vsel %vm78, %v799, -inf
    %v808 = vrot.slane %v807, 4
    %v809 = vmax.f32 %v807, %v808
    %v810 = vrot.slane %v809, 2
    %v811 = vmax.f32 %v809, %v810
    %v812 = vrot.slane %v811, 1
    %v813 = vmax.f32 %v811, %v812
    %v814 = vsub.f32 %v798, %v806
    %v815 = vsub.f32 %v799, %v813
    %v816 = vmul.f32 %v814, 1.442695
    %v817 = vpow.pop %v816
    %v818 = vmul.f32 %v815, 1.442695
    %v819 = vpow.pop %v818
    %v820 = vmul.f32 %v817, %v63
    %v821 = vmul.f32 %v819, %v64
    %v822 = vsel %vm78, %v820, 0.0
    %v823 = vrot.slane %v822, 4
    %v824 = vadd.f32 %v822, %v823
    %v825 = vrot.slane %v824, 2
    %v826 = vadd.f32 %v824, %v825
    %v827 = vrot.slane %v826, 1
    %v828 = vadd.f32 %v826, %v827
    %v829 = vsel %vm78, %v821, 0.0
    %v830 = vrot.slane %v829, 4
    %v831 = vadd.f32 %v829, %v830
    %v832 = vrot.slane %v831, 2
    %v833 = vadd.f32 %v831, %v832
    %v834 = vrot.slane %v833, 1
    %v835 = vadd.f32 %v833, %v834
    %v836 = vmax.f32 %v828, 1e-30
    %v837 = vmax.f32 %v835, 1e-30
    %v838 = vrcp.pop %v836
    %v839 = vrcp.pop %v837
    %v840 = vmul.f32 %v836, %v838
    %v841 = vmul.f32 %v837, %v839
    %v842 = vsub.f32 2.0, %v840
    %v843 = vsub.f32 2.0, %v841
    %v844 = vmul.f32 %v838, %v842
    %v845 = vmul.f32 %v839, %v843
    %v846 = vmul.f32 %v820, %v844
    %v847 = vmul.f32 %v821, %v845
    %849 = vset.pattern.permute.xlu0 0
    %850 = vperm.xlu0 %849, %v846
    %v851 = vpop.permute.xlu0 %850
    %854 = vset.pattern.permute.xlu0 0
    %855 = vperm.xlu0 %854, %v847
    %v856 = vpop.permute.xlu0 %855
    %v858 = vmul.f32 %v851, %v786
    %v859 = vmul.f32 %v856, %v787
    %v860 = vrot.slane %v858, 4
    %v861 = vadd.f32 %v858, %v860
    %v862 = vrot.slane %v861, 2
    %v863 = vadd.f32 %v861, %v862
    %v864 = vrot.slane %v863, 1
    %v865 = vadd.f32 %v863, %v864
    %v866 = vrot.slane %v859, 4
    %v867 = vadd.f32 %v859, %v866
    %v868 = vrot.slane %v867, 2
    %v869 = vadd.f32 %v867, %v868
    %v870 = vrot.slane %v869, 1
    %v871 = vadd.f32 %v869, %v870
    %vm874 = vcmask 1041409
    %v875 = vsel %vm874, %v871, %v865
    %877 = vst [vmem:[#allocation2] sm:$0x3] %v875
    // Predicated region
    $region26: #{fnn_user_embedding.1} parent=1 // pred_check
      _
    $region27: #{fnn_user_embedding.1} parent=1 // pred_check_branch
      %879 = sbr.rel (0) target = $region29
    $region28: #{fnn_user_embedding.1} parent=1 // pred_region
      %s881 = ssub.s32 32, 32
      %882 = vsyncadd [#allocation3], %s881
      %s884 = sshll.u32 [#allocation2], 4
      %s885 = int_to_ptr.vmem [resolvable:$true] %s884
      %887 = dma.vmem_to_hbm [thread:$0]  %s885, 32, %s6, [#allocation3]
    $region29: #{fnn_user_embedding.1} parent=1 // pred_fallthru
      _
    // Predicated region
    $region30: #{fnn_user_embedding.1} parent=1 // pred_check
      _
    $region31: #{fnn_user_embedding.1} parent=1 // pred_check_branch
      %889 = sbr.rel (0) target = $region33
    $region32: #{fnn_user_embedding.1} parent=1 // pred_region
      %890 = dma.done [#allocation3], 32
    $region33: #{fnn_user_embedding.1} parent=1 // pred_fallthru
      _
    %891 = vsyncpa [#allocation3], 1

</llo_original>
